<compile_context>
chip_gen: v7x
topology: tpu7x:2x2x1
jax: 0.10.0
libtpu: 0.0.40
codegen_flags: <defaults>
</compile_context>

<pallas_src>
import functools

import jax
import jax.numpy as jnp
from jax.experimental import pallas as pl
from jax.experimental.pallas import tpu as pltpu


def _label_smoothing_kernel(pred_ref, gt_ref, out_ref, *, smoothing):
    logits = pred_ref[...].astype(jnp.float32)            # (tile_n, C)
    n_class = logits.shape[-1]

    # Numerically stable log-softmax pieces (class axis = lanes).
    m = jnp.max(logits, axis=-1, keepdims=True)            # (tile_n, 1)
    shifted = logits - m                                    # (tile_n, C)
    lse = jnp.log(jnp.sum(jnp.exp(shifted), axis=-1, keepdims=True))  # (tile_n, 1)

    # sum over classes of shifted logits (for the uniform-smoothing term).
    sum_shifted = jnp.sum(shifted, axis=-1, keepdims=True)  # (tile_n, 1)

    # shifted[target] via a single select+reduce (no one_hot materialization).
    gt = gt_ref[...]                                        # (tile_n, 1) int32
    col = jax.lax.broadcasted_iota(jnp.int32, shifted.shape, 1)
    shifted_at_gt = jnp.sum(
        jnp.where(col == gt, shifted, 0.0), axis=-1, keepdims=True)    # (tile_n, 1)

    eps = jnp.float32(smoothing)
    inv_c = jnp.float32(1.0 / n_class)
    # row_loss = eps/C * (-sum(logp)) + (1-eps) * (-logp[target])
    row_loss = lse - (eps * inv_c) * sum_shifted - (1.0 - eps) * shifted_at_gt

    out_ref[...] = row_loss


def _round_up(x, m):
    return ((x + m - 1) // m) * m


def _choose_tile_rows(n_rows, n_class, itemsize, budget_bytes=2 << 20):
    """Pick a big row tile (multiple of 32) bounded by a per-buffer VMEM budget.

    Budget is conservative (2 MiB per pred tile in its input dtype) so that
    double-buffered inputs plus in-kernel f32 temporaries stay well inside the
    default scoped VMEM on every generation (incl. v7x's 64 MiB physical).
    """
    rows = budget_bytes // max(1, n_class * itemsize)
    rows = max(32, min(2048, rows))
    rows = min(rows, max(1, n_rows))     # no need to exceed the problem size
    return _round_up(rows, 32)


def label_smoothing_loss(preds, target, smoothing=0.1, reduction="mean",
                         tile_n=None):
    """Pallas implementation of LabelSmoothingLoss1.forward (weight=None).

    preds: (..., C) float logits (classes on the last axis).
    target: (...) integer class labels in [0, C).
    """
    assert 0.0 <= smoothing < 1.0
    # TODO(synk): per-class `weight` (module default None) is not implemented.
    n_class = preds.shape[-1]
    target_shape = target.shape

    preds2 = preds.reshape(-1, n_class)          # keep original dtype (no f32 cast)
    gt = target.reshape(-1).astype(jnp.int32)
    n_valid = preds2.shape[0]

    if tile_n is None:
        tile_n = _choose_tile_rows(n_valid, n_class,
                                   jnp.dtype(preds2.dtype).itemsize)
    tile_n = max(32, _round_up(int(tile_n), 32))

    n_pad = (-n_valid) % tile_n
    if n_pad:
        preds2 = jnp.pad(preds2, ((0, n_pad), (0, 0)))
        gt = jnp.pad(gt, (0, n_pad))
    n_rows = preds2.shape[0]
    n_tiles = n_rows // tile_n
    gt2 = gt.reshape(n_rows, 1)

    kernel = functools.partial(_label_smoothing_kernel,
                               smoothing=float(smoothing))

    row_losses = pl.pallas_call(
        kernel,
        out_shape=jax.ShapeDtypeStruct((n_rows, 1), jnp.float32),
        grid_spec=pltpu.PrefetchScalarGridSpec(
            num_scalar_prefetch=0,
            grid=(n_tiles,),
            in_specs=[
                pl.BlockSpec((tile_n, n_class), lambda i: (i, 0)),
                pl.BlockSpec((tile_n, 1), lambda i: (i, 0)),
            ],
            out_specs=pl.BlockSpec((tile_n, 1), lambda i: (i, 0)),
        ),
        compiler_params=pltpu.CompilerParams(
            dimension_semantics=("parallel",),
        ),
    )(preds2, gt2)

    per_row = row_losses[:n_valid, 0]
    if reduction == "mean":
        return per_row.mean()
    if reduction == "sum":
        return per_row.sum()
    return per_row.reshape(target_shape)


def _reference(preds, target, smoothing=0.1, reduction="mean"):
    """Pure-JAX mirror of LabelSmoothingLoss1.forward (weight=None)."""
    n = preds.shape[-1]
    log_preds = jax.nn.log_softmax(preds.astype(jnp.float32), axis=-1)
    loss_vec = -log_preds.sum(axis=-1)
    nll_vec = -jnp.take_along_axis(
        log_preds, target[..., None].astype(jnp.int32), axis=-1)[..., 0]

    def reduce(x):
        if reduction == "mean":
            return x.mean()
        if reduction == "sum":
            return x.sum()
        return x

    loss = reduce(loss_vec)
    nll = reduce(nll_vec)
    return smoothing * (loss / n) + (1.0 - smoothing) * nll


if __name__ == "__main__":
    key = jax.random.PRNGKey(0)
    k1, k2 = jax.random.split(key)

    # e.g. batch=8, seq=25 -> 200 rows, 32 classes (classes on last axis).
    N, C = 200, 32
    preds = jax.random.normal(k1, (N, C), dtype=jnp.float32)
    target = jax.random.randint(k2, (N,), 0, C, dtype=jnp.int32)

    loss = jax.block_until_ready(
        label_smoothing_loss(preds, target, smoothing=0.1))
    ref = jax.block_until_ready(_reference(preds, target, smoothing=0.1))
    assert jnp.allclose(loss, ref, atol=1e-5, rtol=1e-5), (loss, ref)

    # Sub-f32 input path: bf16 stays bf16 in HBM, upcast happens inside VMEM.
    preds_bf16 = preds.astype(jnp.bfloat16)
    loss_bf = jax.block_until_ready(
        label_smoothing_loss(preds_bf16, target, smoothing=0.1))
    ref_bf = jax.block_until_ready(_reference(preds_bf16, target, smoothing=0.1))
    assert jnp.allclose(loss_bf, ref_bf, atol=1e-3, rtol=1e-3), (loss_bf, ref_bf)

    print("KERNEL_OK")
</pallas_src>

<mosaic_0001>
module attributes {stable_mosaic.version = 11 : i64} {
  func.func @_label_smoothing_kernel(%arg0: i32, %arg1: memref<224x32xf32, #tpu.memory_space<vmem>>, %arg2: memref<224x1xi32, #tpu.memory_space<vmem>>, %arg3: memref<224x1xf32, #tpu.memory_space<vmem>>) attributes {dimension_semantics = [#tpu.dimension_semantics<parallel>], iteration_bounds = array<i64: 1>, scalar_prefetch = 0 : i64, scratch_operands = 0 : i64, tpu.core_type = #tpu.core_type<tc>, window_params = [{transform_indices = @transform_0, window_bounds = array<i64: 224, 32>}, {transform_indices = @transform_1, window_bounds = array<i64: 224, 1>}, {transform_indices = @transform_2, window_bounds = array<i64: 224, 1>}]} {
    %c0 = arith.constant 0 : index
    %c0_0 = arith.constant 0 : index
    %0 = vector.load %arg1[%c0, %c0_0] : memref<224x32xf32, #tpu.memory_space<vmem>>, vector<224x32xf32>
    %cst = arith.constant dense<0xFF800000> : vector<224xf32>
    %1 = vector.multi_reduction <maximumf>, %0, %cst [1] : vector<224x32xf32> to vector<224xf32>
    %2 = vector.shape_cast %1 : vector<224xf32> to vector<224x1xf32>
    %3 = vector.broadcast %2 : vector<224x1xf32> to vector<224x32xf32>
    %4 = arith.subf %0, %3 : vector<224x32xf32>
    %5 = math.exp %4 : vector<224x32xf32>
    %cst_1 = arith.constant dense<0.000000e+00> : vector<224xf32>
    %6 = vector.multi_reduction <add>, %5, %cst_1 [1] : vector<224x32xf32> to vector<224xf32>
    %7 = vector.shape_cast %6 : vector<224xf32> to vector<224x1xf32>
    %8 = math.log %7 : vector<224x1xf32>
    %cst_2 = arith.constant dense<0.000000e+00> : vector<224xf32>
    %9 = vector.multi_reduction <add>, %4, %cst_2 [1] : vector<224x32xf32> to vector<224xf32>
    %10 = vector.shape_cast %9 : vector<224xf32> to vector<224x1xf32>
    %c0_3 = arith.constant 0 : index
    %c0_4 = arith.constant 0 : index
    %11 = vector.load %arg2[%c0_3, %c0_4] : memref<224x1xi32, #tpu.memory_space<vmem>>, vector<224x1xi32>
    %12 = tpu.iota {dimensions = array<i32: 1>} : vector<224x32xi32>
    %13 = vector.broadcast %11 : vector<224x1xi32> to vector<224x32xi32>
    %14 = arith.cmpi eq, %12, %13 : vector<224x32xi32>
    %cst_5 = arith.constant 0.000000e+00 : f32
    %15 = vector.broadcast %cst_5 : f32 to vector<224x32xf32>
    %16 = arith.select %14, %4, %15 : vector<224x32xi1>, vector<224x32xf32>
    %cst_6 = arith.constant dense<0.000000e+00> : vector<224xf32>
    %17 = vector.multi_reduction <add>, %16, %cst_6 [1] : vector<224x32xf32> to vector<224xf32>
    %18 = vector.shape_cast %17 : vector<224xf32> to vector<224x1xf32>
    %cst_7 = arith.constant 1.000000e-01 : f32
    %cst_8 = arith.constant 3.125000e-02 : f32
    %19 = arith.mulf %cst_7, %cst_8 : f32
    %20 = vector.broadcast %19 : f32 to vector<224x1xf32>
    %21 = arith.mulf %20, %10 : vector<224x1xf32>
    %22 = arith.subf %8, %21 : vector<224x1xf32>
    %cst_9 = arith.constant 1.000000e+00 : f32
    %cst_10 = arith.constant 1.000000e-01 : f32
    %23 = arith.subf %cst_9, %cst_10 : f32
    %24 = vector.broadcast %23 : f32 to vector<224x1xf32>
    %25 = arith.mulf %24, %18 : vector<224x1xf32>
    %26 = arith.subf %22, %25 : vector<224x1xf32>
    %c0_11 = arith.constant 0 : index
    %c0_12 = arith.constant 0 : index
    %27 = vector.load %arg3[%c0_11, %c0_12] : memref<224x1xf32, #tpu.memory_space<vmem>>, vector<224x1xf32>
    tpu.vector_store %arg3[%c0_11, %c0_12], %26 {strides = array<i32>} : memref<224x1xf32, #tpu.memory_space<vmem>>, vector<224x1xf32>,
    return
  }
  func.func @transform_0(%arg0: i32) -> (i32, i32) {
    %c0_i32 = arith.constant 0 : i32
    %c0_i32_0 = arith.constant 0 : i32
    return %arg0, %c0_i32 : i32, i32
  }
  func.func @transform_1(%arg0: i32) -> (i32, i32) {
    %c0_i32 = arith.constant 0 : i32
    %c0_i32_0 = arith.constant 0 : i32
    return %arg0, %c0_i32 : i32, i32
  }
  func.func @transform_2(%arg0: i32) -> (i32, i32) {
    %c0_i32 = arith.constant 0 : i32
    %c0_i32_0 = arith.constant 0 : i32
    return %arg0, %c0_i32 : i32, i32
  }
}

</mosaic_0001>

<llo_original>
// kernel: tpu_custom_call.1
$region0: #{tpu_custom_call.1}
  #allocation0 [shape = 'u32[]', space=smem, size = 0x4, offset = 0x4, fixed_abs, tag = 'smem constant byte address 0x4 - core index']
  #allocation1 [shape = 'u32[144,128]{1,0:T(1,128)}', space=vmem, size = 0x12000, scoped, tag = 'internal scratch']
  %s0 = inlined_call_operand.vmem [shape: f32[224,32], index: 0, kind: input, shape index: {}]
  %s1 = inlined_call_operand.vmem [shape: s32[224,1], index: 1, kind: input, shape index: {}]
  %s2 = inlined_call_operand.vmem [shape: f32[224,1], index: 2, kind: output, shape index: {}]
  %s3 = sld [smem:[#allocation0]]
  $region18: #{tpu_custom_call.1} parent=0
    _
  %s5 = ssub.s32 1, %s3
  %s6 = scalar_select 0, %s5, %s3
  // Predicated region
  $region2: #{tpu_custom_call.1} parent=0 // pred_check
    _
  $region3: #{tpu_custom_call.1} parent=0 // pred_check_branch
    %8 = sbr.rel (0) target = $region5
  $region4: #{tpu_custom_call.1} parent=0 // pred_region
    _
  $region5: #{tpu_custom_call.1} parent=0 // pred_fallthru
    _
  // Predicated region
  $region6: #{tpu_custom_call.1} parent=0 // pred_check
    _
  $region7: #{tpu_custom_call.1} parent=0 // pred_check_branch
    %10 = sbr.rel (0) target = $region9
  $region8: #{tpu_custom_call.1} parent=0 // pred_region
    _
  $region9: #{tpu_custom_call.1} parent=0 // pred_fallthru
    _
  %v11 = vld [vmem:[%s0] sm:$0xff]
  %v12 = vld [vmem:[%s0 + $0x8] sm:$0xff]
  %v13 = vld [vmem:[%s0 + $0x10] sm:$0xff]
  %v14 = vld [vmem:[%s0 + $0x18] sm:$0xff]
  %v15 = vld [vmem:[%s0 + $0x20] sm:$0xff]
  %v16 = vld [vmem:[%s0 + $0x28] sm:$0xff]
  %v17 = vld [vmem:[%s0 + $0x30] sm:$0xff]
  %v18 = vld [vmem:[%s0 + $0x38] sm:$0xff]
  %v19 = vld [vmem:[%s0 + $0x40] sm:$0xff]
  %v20 = vld [vmem:[%s0 + $0x48] sm:$0xff]
  %v21 = vld [vmem:[%s0 + $0x50] sm:$0xff]
  %v22 = vld [vmem:[%s0 + $0x58] sm:$0xff]
  %v23 = vld [vmem:[%s0 + $0x60] sm:$0xff]
  %v24 = vld [vmem:[%s0 + $0x68] sm:$0xff]
  %v25 = vld [vmem:[%s0 + $0x70] sm:$0xff]
  %v26 = vld [vmem:[%s0 + $0x78] sm:$0xff]
  %v27 = vld [vmem:[%s0 + $0x80] sm:$0xff]
  %v28 = vld [vmem:[%s0 + $0x88] sm:$0xff]
  %v29 = vld [vmem:[%s0 + $0x90] sm:$0xff]
  %v30 = vld [vmem:[%s0 + $0x98] sm:$0xff]
  %v31 = vld [vmem:[%s0 + $0xa0] sm:$0xff]
  %v32 = vld [vmem:[%s0 + $0xa8] sm:$0xff]
  %v33 = vld [vmem:[%s0 + $0xb0] sm:$0xff]
  %v34 = vld [vmem:[%s0 + $0xb8] sm:$0xff]
  %v35 = vld [vmem:[%s0 + $0xc0] sm:$0xff]
  %v36 = vld [vmem:[%s0 + $0xc8] sm:$0xff]
  %v37 = vld [vmem:[%s0 + $0xd0] sm:$0xff]
  %v38 = vld [vmem:[%s0 + $0xd8] sm:$0xff]
  %vm39 = vcmask 261120
  %v40 = vsel %vm39, %v11, -inf
  %41 = vmax.xlane.f32.xlu0 %v40
  %v42 = vpop.xlane.xlu0 %41
  %v43 = vsel %vm39, %v12, -inf
  %44 = vmax.xlane.f32.xlu0 %v43
  %v45 = vpop.xlane.xlu0 %44
  %v46 = vsel %vm39, %v13, -inf
  %47 = vmax.xlane.f32.xlu0 %v46
  %v48 = vpop.xlane.xlu0 %47
  %v49 = vsel %vm39, %v14, -inf
  %50 = vmax.xlane.f32.xlu0 %v49
  %v51 = vpop.xlane.xlu0 %50
  %v52 = vsel %vm39, %v15, -inf
  %53 = vmax.xlane.f32.xlu0 %v52
  %v54 = vpop.xlane.xlu0 %53
  %v55 = vsel %vm39, %v16, -inf
  %56 = vmax.xlane.f32.xlu0 %v55
  %v57 = vpop.xlane.xlu0 %56
  %v58 = vsel %vm39, %v17, -inf
  %59 = vmax.xlane.f32.xlu0 %v58
  %v60 = vpop.xlane.xlu0 %59
  %v61 = vsel %vm39, %v18, -inf
  %62 = vmax.xlane.f32.xlu0 %v61
  %v63 = vpop.xlane.xlu0 %62
  %v64 = vsel %vm39, %v19, -inf
  %65 = vmax.xlane.f32.xlu0 %v64
  %v66 = vpop.xlane.xlu0 %65
  %v67 = vsel %vm39, %v20, -inf
  %68 = vmax.xlane.f32.xlu0 %v67
  %v69 = vpop.xlane.xlu0 %68
  %v70 = vsel %vm39, %v21, -inf
  %71 = vmax.xlane.f32.xlu0 %v70
  %v72 = vpop.xlane.xlu0 %71
  %v73 = vsel %vm39, %v22, -inf
  %74 = vmax.xlane.f32.xlu0 %v73
  %v75 = vpop.xlane.xlu0 %74
  %v76 = vsel %vm39, %v23, -inf
  %77 = vmax.xlane.f32.xlu0 %v76
  %v78 = vpop.xlane.xlu0 %77
  %v79 = vsel %vm39, %v24, -inf
  %80 = vmax.xlane.f32.xlu0 %v79
  %v81 = vpop.xlane.xlu0 %80
  %v82 = vsel %vm39, %v25, -inf
  %83 = vmax.xlane.f32.xlu0 %v82
  %v84 = vpop.xlane.xlu0 %83
  %v85 = vsel %vm39, %v26, -inf
  %86 = vmax.xlane.f32.xlu0 %v85
  %v87 = vpop.xlane.xlu0 %86
  %v88 = vsel %vm39, %v27, -inf
  %89 = vmax.xlane.f32.xlu0 %v88
  %v90 = vpop.xlane.xlu0 %89
  %v91 = vsel %vm39, %v28, -inf
  %92 = vmax.xlane.f32.xlu0 %v91
  %v93 = vpop.xlane.xlu0 %92
  %v94 = vsel %vm39, %v29, -inf
  %95 = vmax.xlane.f32.xlu0 %v94
  %v96 = vpop.xlane.xlu0 %95
  %v97 = vsel %vm39, %v30, -inf
  %98 = vmax.xlane.f32.xlu0 %v97
  %v99 = vpop.xlane.xlu0 %98
  %v100 = vsel %vm39, %v31, -inf
  %101 = vmax.xlane.f32.xlu0 %v100
  %v102 = vpop.xlane.xlu0 %101
  %v103 = vsel %vm39, %v32, -inf
  %104 = vmax.xlane.f32.xlu0 %v103
  %v105 = vpop.xlane.xlu0 %104
  %v106 = vsel %vm39, %v33, -inf
  %107 = vmax.xlane.f32.xlu0 %v106
  %v108 = vpop.xlane.xlu0 %107
  %v109 = vsel %vm39, %v34, -inf
  %110 = vmax.xlane.f32.xlu0 %v109
  %v111 = vpop.xlane.xlu0 %110
  %v112 = vsel %vm39, %v35, -inf
  %113 = vmax.xlane.f32.xlu0 %v112
  %v114 = vpop.xlane.xlu0 %113
  %v115 = vsel %vm39, %v36, -inf
  %116 = vmax.xlane.f32.xlu0 %v115
  %v117 = vpop.xlane.xlu0 %116
  %v118 = vsel %vm39, %v37, -inf
  %119 = vmax.xlane.f32.xlu0 %v118
  %v120 = vpop.xlane.xlu0 %119
  %v121 = vsel %vm39, %v38, -inf
  %122 = vmax.xlane.f32.xlu0 %v121
  %v123 = vpop.xlane.xlu0 %122
  %v124 = vsub.f32 %v11, %v42
  %v125 = vsub.f32 %v12, %v45
  %v126 = vsub.f32 %v13, %v48
  %v127 = vsub.f32 %v14, %v51
  %v128 = vsub.f32 %v15, %v54
  %v129 = vsub.f32 %v16, %v57
  %v130 = vsub.f32 %v17, %v60
  %v131 = vsub.f32 %v18, %v63
  %v132 = vsub.f32 %v19, %v66
  %v133 = vsub.f32 %v20, %v69
  %v134 = vsub.f32 %v21, %v72
  %v135 = vsub.f32 %v22, %v75
  %v136 = vsub.f32 %v23, %v78
  %v137 = vsub.f32 %v24, %v81
  %v138 = vsub.f32 %v25, %v84
  %v139 = vsub.f32 %v26, %v87
  %v140 = vsub.f32 %v27, %v90
  %v141 = vsub.f32 %v28, %v93
  %v142 = vsub.f32 %v29, %v96
  %v143 = vsub.f32 %v30, %v99
  %v144 = vsub.f32 %v31, %v102
  %v145 = vsub.f32 %v32, %v105
  %v146 = vsub.f32 %v33, %v108
  %v147 = vsub.f32 %v34, %v111
  %v148 = vsub.f32 %v35, %v114
  %v149 = vsub.f32 %v36, %v117
  %v150 = vsub.f32 %v37, %v120
  %v151 = vsub.f32 %v38, %v123
  %v152 = vmul.f32 %v124, 1.442695
  %v153 = vpow.pop %v152
  %v154 = vmul.f32 %v125, 1.442695
  %v155 = vpow.pop %v154
  %v156 = vmul.f32 %v126, 1.442695
  %v157 = vpow.pop %v156
  %v158 = vmul.f32 %v127, 1.442695
  %v159 = vpow.pop %v158
  %v160 = vmul.f32 %v128, 1.442695
  %v161 = vpow.pop %v160
  %v162 = vmul.f32 %v129, 1.442695
  %v163 = vpow.pop %v162
  %v164 = vmul.f32 %v130, 1.442695
  %v165 = vpow.pop %v164
  %v166 = vmul.f32 %v131, 1.442695
  %v167 = vpow.pop %v166
  %v168 = vmul.f32 %v132, 1.442695
  %v169 = vpow.pop %v168
  %v170 = vmul.f32 %v133, 1.442695
  %v171 = vpow.pop %v170
  %v172 = vmul.f32 %v134, 1.442695
  %v173 = vpow.pop %v172
  %v174 = vmul.f32 %v135, 1.442695
  %v175 = vpow.pop %v174
  %v176 = vmul.f32 %v136, 1.442695
  %v177 = vpow.pop %v176
  %v178 = vmul.f32 %v137, 1.442695
  %v179 = vpow.pop %v178
  %v180 = vmul.f32 %v138, 1.442695
  %v181 = vpow.pop %v180
  %v182 = vmul.f32 %v139, 1.442695
  %v183 = vpow.pop %v182
  %v184 = vmul.f32 %v140, 1.442695
  %v185 = vpow.pop %v184
  %v186 = vmul.f32 %v141, 1.442695
  %v187 = vpow.pop %v186
  %v188 = vmul.f32 %v142, 1.442695
  %v189 = vpow.pop %v188
  %v190 = vmul.f32 %v143, 1.442695
  %v191 = vpow.pop %v190
  %v192 = vmul.f32 %v144, 1.442695
  %v193 = vpow.pop %v192
  %v194 = vmul.f32 %v145, 1.442695
  %v195 = vpow.pop %v194
  %v196 = vmul.f32 %v146, 1.442695
  %v197 = vpow.pop %v196
  %v198 = vmul.f32 %v147, 1.442695
  %v199 = vpow.pop %v198
  %v200 = vmul.f32 %v148, 1.442695
  %v201 = vpow.pop %v200
  %v202 = vmul.f32 %v149, 1.442695
  %v203 = vpow.pop %v202
  %v204 = vmul.f32 %v150, 1.442695
  %v205 = vpow.pop %v204
  %v206 = vmul.f32 %v151, 1.442695
  %v207 = vpow.pop %v206
  %v208 = vsel %vm39, %v153, 0.0
  %209 = vadd.xlane.f32.xlu0 %v208
  %v210 = vpop.xlane.xlu0 %209
  %v211 = vsel %vm39, %v155, 0.0
  %212 = vadd.xlane.f32.xlu0 %v211
  %v213 = vpop.xlane.xlu0 %212
  %v214 = vsel %vm39, %v157, 0.0
  %215 = vadd.xlane.f32.xlu0 %v214
  %v216 = vpop.xlane.xlu0 %215
  %v217 = vsel %vm39, %v159, 0.0
  %218 = vadd.xlane.f32.xlu0 %v217
  %v219 = vpop.xlane.xlu0 %218
  %v220 = vsel %vm39, %v161, 0.0
  %221 = vadd.xlane.f32.xlu0 %v220
  %v222 = vpop.xlane.xlu0 %221
  %v223 = vsel %vm39, %v163, 0.0
  %224 = vadd.xlane.f32.xlu0 %v223
  %v225 = vpop.xlane.xlu0 %224
  %v226 = vsel %vm39, %v165, 0.0
  %227 = vadd.xlane.f32.xlu0 %v226
  %v228 = vpop.xlane.xlu0 %227
  %v229 = vsel %vm39, %v167, 0.0
  %230 = vadd.xlane.f32.xlu0 %v229
  %v231 = vpop.xlane.xlu0 %230
  %v232 = vsel %vm39, %v169, 0.0
  %233 = vadd.xlane.f32.xlu0 %v232
  %v234 = vpop.xlane.xlu0 %233
  %v235 = vsel %vm39, %v171, 0.0
  %236 = vadd.xlane.f32.xlu0 %v235
  %v237 = vpop.xlane.xlu0 %236
  %v238 = vsel %vm39, %v173, 0.0
  %239 = vadd.xlane.f32.xlu0 %v238
  %v240 = vpop.xlane.xlu0 %239
  %v241 = vsel %vm39, %v175, 0.0
  %242 = vadd.xlane.f32.xlu0 %v241
  %v243 = vpop.xlane.xlu0 %242
  %v244 = vsel %vm39, %v177, 0.0
  %245 = vadd.xlane.f32.xlu0 %v244
  %v246 = vpop.xlane.xlu0 %245
  %v247 = vsel %vm39, %v179, 0.0
  %248 = vadd.xlane.f32.xlu0 %v247
  %v249 = vpop.xlane.xlu0 %248
  %v250 = vsel %vm39, %v181, 0.0
  %251 = vadd.xlane.f32.xlu0 %v250
  %v252 = vpop.xlane.xlu0 %251
  %v253 = vsel %vm39, %v183, 0.0
  %254 = vadd.xlane.f32.xlu0 %v253
  %v255 = vpop.xlane.xlu0 %254
  %v256 = vsel %vm39, %v185, 0.0
  %257 = vadd.xlane.f32.xlu0 %v256
  %v258 = vpop.xlane.xlu0 %257
  %v259 = vsel %vm39, %v187, 0.0
  %260 = vadd.xlane.f32.xlu0 %v259
  %v261 = vpop.xlane.xlu0 %260
  %v262 = vsel %vm39, %v189, 0.0
  %263 = vadd.xlane.f32.xlu0 %v262
  %v264 = vpop.xlane.xlu0 %263
  %v265 = vsel %vm39, %v191, 0.0
  %266 = vadd.xlane.f32.xlu0 %v265
  %v267 = vpop.xlane.xlu0 %266
  %v268 = vsel %vm39, %v193, 0.0
  %269 = vadd.xlane.f32.xlu0 %v268
  %v270 = vpop.xlane.xlu0 %269
  %v271 = vsel %vm39, %v195, 0.0
  %272 = vadd.xlane.f32.xlu0 %v271
  %v273 = vpop.xlane.xlu0 %272
  %v274 = vsel %vm39, %v197, 0.0
  %275 = vadd.xlane.f32.xlu0 %v274
  %v276 = vpop.xlane.xlu0 %275
  %v277 = vsel %vm39, %v199, 0.0
  %278 = vadd.xlane.f32.xlu0 %v277
  %v279 = vpop.xlane.xlu0 %278
  %v280 = vsel %vm39, %v201, 0.0
  %281 = vadd.xlane.f32.xlu0 %v280
  %v282 = vpop.xlane.xlu0 %281
  %v283 = vsel %vm39, %v203, 0.0
  %284 = vadd.xlane.f32.xlu0 %v283
  %v285 = vpop.xlane.xlu0 %284
  %v286 = vsel %vm39, %v205, 0.0
  %287 = vadd.xlane.f32.xlu0 %v286
  %v288 = vpop.xlane.xlu0 %287
  %v289 = vsel %vm39, %v207, 0.0
  %290 = vadd.xlane.f32.xlu0 %v289
  %v291 = vpop.xlane.xlu0 %290
  %v292 = vlog2.pop %v210
  %v293 = vmul.f32 %v292, 0.6931472
  %v294 = vlog2.pop %v213
  %v295 = vmul.f32 %v294, 0.6931472
  %v296 = vlog2.pop %v216
  %v297 = vmul.f32 %v296, 0.6931472
  %v298 = vlog2.pop %v219
  %v299 = vmul.f32 %v298, 0.6931472
  %v300 = vlog2.pop %v222
  %v301 = vmul.f32 %v300, 0.6931472
  %v302 = vlog2.pop %v225
  %v303 = vmul.f32 %v302, 0.6931472
  %v304 = vlog2.pop %v228
  %v305 = vmul.f32 %v304, 0.6931472
  %v306 = vlog2.pop %v231
  %v307 = vmul.f32 %v306, 0.6931472
  %v308 = vlog2.pop %v234
  %v309 = vmul.f32 %v308, 0.6931472
  %v310 = vlog2.pop %v237
  %v311 = vmul.f32 %v310, 0.6931472
  %v312 = vlog2.pop %v240
  %v313 = vmul.f32 %v312, 0.6931472
  %v314 = vlog2.pop %v243
  %v315 = vmul.f32 %v314, 0.6931472
  %v316 = vlog2.pop %v246
  %v317 = vmul.f32 %v316, 0.6931472
  %v318 = vlog2.pop %v249
  %v319 = vmul.f32 %v318, 0.6931472
  %v320 = vlog2.pop %v252
  %v321 = vmul.f32 %v320, 0.6931472
  %v322 = vlog2.pop %v255
  %v323 = vmul.f32 %v322, 0.6931472
  %v324 = vlog2.pop %v258
  %v325 = vmul.f32 %v324, 0.6931472
  %v326 = vlog2.pop %v261
  %v327 = vmul.f32 %v326, 0.6931472
  %v328 = vlog2.pop %v264
  %v329 = vmul.f32 %v328, 0.6931472
  %v330 = vlog2.pop %v267
  %v331 = vmul.f32 %v330, 0.6931472
  %v332 = vlog2.pop %v270
  %v333 = vmul.f32 %v332, 0.6931472
  %v334 = vlog2.pop %v273
  %v335 = vmul.f32 %v334, 0.6931472
  %v336 = vlog2.pop %v276
  %v337 = vmul.f32 %v336, 0.6931472
  %v338 = vlog2.pop %v279
  %v339 = vmul.f32 %v338, 0.6931472
  %v340 = vlog2.pop %v282
  %v341 = vmul.f32 %v340, 0.6931472
  %v342 = vlog2.pop %v285
  %v343 = vmul.f32 %v342, 0.6931472
  %v344 = vlog2.pop %v288
  %v345 = vmul.f32 %v344, 0.6931472
  %v346 = vlog2.pop %v291
  %v347 = vmul.f32 %v346, 0.6931472
  %v348 = vsel %vm39, %v124, 0.0
  %349 = vadd.xlane.f32.xlu0 %v348
  %v350 = vpop.xlane.xlu0 %349
  %v351 = vsel %vm39, %v125, 0.0
  %352 = vadd.xlane.f32.xlu0 %v351
  %v353 = vpop.xlane.xlu0 %352
  %v354 = vsel %vm39, %v126, 0.0
  %355 = vadd.xlane.f32.xlu0 %v354
  %v356 = vpop.xlane.xlu0 %355
  %v357 = vsel %vm39, %v127, 0.0
  %358 = vadd.xlane.f32.xlu0 %v357
  %v359 = vpop.xlane.xlu0 %358
  %v360 = vsel %vm39, %v128, 0.0
  %361 = vadd.xlane.f32.xlu0 %v360
  %v362 = vpop.xlane.xlu0 %361
  %v363 = vsel %vm39, %v129, 0.0
  %364 = vadd.xlane.f32.xlu0 %v363
  %v365 = vpop.xlane.xlu0 %364
  %v366 = vsel %vm39, %v130, 0.0
  %367 = vadd.xlane.f32.xlu0 %v366
  %v368 = vpop.xlane.xlu0 %367
  %v369 = vsel %vm39, %v131, 0.0
  %370 = vadd.xlane.f32.xlu0 %v369
  %v371 = vpop.xlane.xlu0 %370
  %v372 = vsel %vm39, %v132, 0.0
  %373 = vadd.xlane.f32.xlu0 %v372
  %v374 = vpop.xlane.xlu0 %373
  %v375 = vsel %vm39, %v133, 0.0
  %376 = vadd.xlane.f32.xlu0 %v375
  %v377 = vpop.xlane.xlu0 %376
  %v378 = vsel %vm39, %v134, 0.0
  %379 = vadd.xlane.f32.xlu0 %v378
  %v380 = vpop.xlane.xlu0 %379
  %v381 = vsel %vm39, %v135, 0.0
  %382 = vadd.xlane.f32.xlu0 %v381
  %v383 = vpop.xlane.xlu0 %382
  %v384 = vsel %vm39, %v136, 0.0
  %385 = vadd.xlane.f32.xlu0 %v384
  %v386 = vpop.xlane.xlu0 %385
  %v387 = vsel %vm39, %v137, 0.0
  %388 = vadd.xlane.f32.xlu0 %v387
  %v389 = vpop.xlane.xlu0 %388
  %v390 = vsel %vm39, %v138, 0.0
  %391 = vadd.xlane.f32.xlu0 %v390
  %v392 = vpop.xlane.xlu0 %391
  %v393 = vsel %vm39, %v139, 0.0
  %394 = vadd.xlane.f32.xlu0 %v393
  %v395 = vpop.xlane.xlu0 %394
  %v396 = vsel %vm39, %v140, 0.0
  %397 = vadd.xlane.f32.xlu0 %v396
  %v398 = vpop.xlane.xlu0 %397
  %v399 = vsel %vm39, %v141, 0.0
  %400 = vadd.xlane.f32.xlu0 %v399
  %v401 = vpop.xlane.xlu0 %400
  %v402 = vsel %vm39, %v142, 0.0
  %403 = vadd.xlane.f32.xlu0 %v402
  %v404 = vpop.xlane.xlu0 %403
  %v405 = vsel %vm39, %v143, 0.0
  %406 = vadd.xlane.f32.xlu0 %v405
  %v407 = vpop.xlane.xlu0 %406
  %v408 = vsel %vm39, %v144, 0.0
  %409 = vadd.xlane.f32.xlu0 %v408
  %v410 = vpop.xlane.xlu0 %409
  %v411 = vsel %vm39, %v145, 0.0
  %412 = vadd.xlane.f32.xlu0 %v411
  %v413 = vpop.xlane.xlu0 %412
  %v414 = vsel %vm39, %v146, 0.0
  %415 = vadd.xlane.f32.xlu0 %v414
  %v416 = vpop.xlane.xlu0 %415
  %v417 = vsel %vm39, %v147, 0.0
  %418 = vadd.xlane.f32.xlu0 %v417
  %v419 = vpop.xlane.xlu0 %418
  %v420 = vsel %vm39, %v148, 0.0
  %421 = vadd.xlane.f32.xlu0 %v420
  %v422 = vpop.xlane.xlu0 %421
  %v423 = vsel %vm39, %v149, 0.0
  %424 = vadd.xlane.f32.xlu0 %v423
  %v425 = vpop.xlane.xlu0 %424
  %v426 = vsel %vm39, %v150, 0.0
  %427 = vadd.xlane.f32.xlu0 %v426
  %v428 = vpop.xlane.xlu0 %427
  %v429 = vsel %vm39, %v151, 0.0
  %430 = vadd.xlane.f32.xlu0 %v429
  %v431 = vpop.xlane.xlu0 %430
  %v432 = vld [vmem:[%s1] sm:$0xff]
  %v433 = vld [vmem:[%s1 + $0x8] sm:$0xff]
  %v434 = vld [vmem:[%s1 + $0x10] sm:$0xff]
  %v435 = vld [vmem:[%s1 + $0x18] sm:$0xff]
  %v436 = vld [vmem:[%s1 + $0x20] sm:$0xff]
  %v437 = vld [vmem:[%s1 + $0x28] sm:$0xff]
  %v438 = vld [vmem:[%s1 + $0x30] sm:$0xff]
  %v439 = vld [vmem:[%s1 + $0x38] sm:$0xff]
  %v440 = vld [vmem:[%s1 + $0x40] sm:$0xff]
  %v441 = vld [vmem:[%s1 + $0x48] sm:$0xff]
  %v442 = vld [vmem:[%s1 + $0x50] sm:$0xff]
  %v443 = vld [vmem:[%s1 + $0x58] sm:$0xff]
  %v444 = vld [vmem:[%s1 + $0x60] sm:$0xff]
  %v445 = vld [vmem:[%s1 + $0x68] sm:$0xff]
  %v446 = vld [vmem:[%s1 + $0x70] sm:$0xff]
  %v447 = vld [vmem:[%s1 + $0x78] sm:$0xff]
  %v448 = vld [vmem:[%s1 + $0x80] sm:$0xff]
  %v449 = vld [vmem:[%s1 + $0x88] sm:$0xff]
  %v450 = vld [vmem:[%s1 + $0x90] sm:$0xff]
  %v451 = vld [vmem:[%s1 + $0x98] sm:$0xff]
  %v452 = vld [vmem:[%s1 + $0xa0] sm:$0xff]
  %v453 = vld [vmem:[%s1 + $0xa8] sm:$0xff]
  %v454 = vld [vmem:[%s1 + $0xb0] sm:$0xff]
  %v455 = vld [vmem:[%s1 + $0xb8] sm:$0xff]
  %v456 = vld [vmem:[%s1 + $0xc0] sm:$0xff]
  %v457 = vld [vmem:[%s1 + $0xc8] sm:$0xff]
  %v458 = vld [vmem:[%s1 + $0xd0] sm:$0xff]
  %v459 = vld [vmem:[%s1 + $0xd8] sm:$0xff]
  %v460 = vlaneseq
  %v461 = vand.u32 %v460, 127
  %462 = vset.pattern.permute.xlu0 0
  %463 = vperm.xlu0 %462, %v432
  %v464 = vpop.permute.xlu0 %463
  %465 = vset.pattern.permute.xlu0 0
  %466 = vperm.xlu0 %465, %v433
  %v467 = vpop.permute.xlu0 %466
  %468 = vset.pattern.permute.xlu0 0
  %469 = vperm.xlu0 %468, %v434
  %v470 = vpop.permute.xlu0 %469
  %471 = vset.pattern.permute.xlu0 0
  %472 = vperm.xlu0 %471, %v435
  %v473 = vpop.permute.xlu0 %472
  %474 = vset.pattern.permute.xlu0 0
  %475 = vperm.xlu0 %474, %v436
  %v476 = vpop.permute.xlu0 %475
  %477 = vset.pattern.permute.xlu0 0
  %478 = vperm.xlu0 %477, %v437
  %v479 = vpop.permute.xlu0 %478
  %480 = vset.pattern.permute.xlu0 0
  %481 = vperm.xlu0 %480, %v438
  %v482 = vpop.permute.xlu0 %481
  %483 = vset.pattern.permute.xlu0 0
  %484 = vperm.xlu0 %483, %v439
  %v485 = vpop.permute.xlu0 %484
  %486 = vset.pattern.permute.xlu0 0
  %487 = vperm.xlu0 %486, %v440
  %v488 = vpop.permute.xlu0 %487
  %489 = vset.pattern.permute.xlu0 0
  %490 = vperm.xlu0 %489, %v441
  %v491 = vpop.permute.xlu0 %490
  %492 = vset.pattern.permute.xlu0 0
  %493 = vperm.xlu0 %492, %v442
  %v494 = vpop.permute.xlu0 %493
  %495 = vset.pattern.permute.xlu0 0
  %496 = vperm.xlu0 %495, %v443
  %v497 = vpop.permute.xlu0 %496
  %498 = vset.pattern.permute.xlu0 0
  %499 = vperm.xlu0 %498, %v444
  %v500 = vpop.permute.xlu0 %499
  %501 = vset.pattern.permute.xlu0 0
  %502 = vperm.xlu0 %501, %v445
  %v503 = vpop.permute.xlu0 %502
  %504 = vset.pattern.permute.xlu0 0
  %505 = vperm.xlu0 %504, %v446
  %v506 = vpop.permute.xlu0 %505
  %507 = vset.pattern.permute.xlu0 0
  %508 = vperm.xlu0 %507, %v447
  %v509 = vpop.permute.xlu0 %508
  %510 = vset.pattern.permute.xlu0 0
  %511 = vperm.xlu0 %510, %v448
  %v512 = vpop.permute.xlu0 %511
  %513 = vset.pattern.permute.xlu0 0
  %514 = vperm.xlu0 %513, %v449
  %v515 = vpop.permute.xlu0 %514
  %516 = vset.pattern.permute.xlu0 0
  %517 = vperm.xlu0 %516, %v450
  %v518 = vpop.permute.xlu0 %517
  %519 = vset.pattern.permute.xlu0 0
  %520 = vperm.xlu0 %519, %v451
  %v521 = vpop.permute.xlu0 %520
  %522 = vset.pattern.permute.xlu0 0
  %523 = vperm.xlu0 %522, %v452
  %v524 = vpop.permute.xlu0 %523
  %525 = vset.pattern.permute.xlu0 0
  %526 = vperm.xlu0 %525, %v453
  %v527 = vpop.permute.xlu0 %526
  %528 = vset.pattern.permute.xlu0 0
  %529 = vperm.xlu0 %528, %v454
  %v530 = vpop.permute.xlu0 %529
  %531 = vset.pattern.permute.xlu0 0
  %532 = vperm.xlu0 %531, %v455
  %v533 = vpop.permute.xlu0 %532
  %534 = vset.pattern.permute.xlu0 0
  %535 = vperm.xlu0 %534, %v456
  %v536 = vpop.permute.xlu0 %535
  %537 = vset.pattern.permute.xlu0 0
  %538 = vperm.xlu0 %537, %v457
  %v539 = vpop.permute.xlu0 %538
  %540 = vset.pattern.permute.xlu0 0
  %541 = vperm.xlu0 %540, %v458
  %v542 = vpop.permute.xlu0 %541
  %543 = vset.pattern.permute.xlu0 0
  %544 = vperm.xlu0 %543, %v459
  %v545 = vpop.permute.xlu0 %544
  %vm546 = vcmp.eq.s32.totalorder %v461, %v464
  %vm547 = vcmp.eq.s32.totalorder %v461, %v467
  %vm548 = vcmp.eq.s32.totalorder %v461, %v470
  %vm549 = vcmp.eq.s32.totalorder %v461, %v473
  %vm550 = vcmp.eq.s32.totalorder %v461, %v476
  %vm551 = vcmp.eq.s32.totalorder %v461, %v479
  %vm552 = vcmp.eq.s32.totalorder %v461, %v482
  %vm553 = vcmp.eq.s32.totalorder %v461, %v485
  %vm554 = vcmp.eq.s32.totalorder %v461, %v488
  %vm555 = vcmp.eq.s32.totalorder %v461, %v491
  %vm556 = vcmp.eq.s32.totalorder %v461, %v494
  %vm557 = vcmp.eq.s32.totalorder %v461, %v497
  %vm558 = vcmp.eq.s32.totalorder %v461, %v500
  %vm559 = vcmp.eq.s32.totalorder %v461, %v503
  %vm560 = vcmp.eq.s32.totalorder %v461, %v506
  %vm561 = vcmp.eq.s32.totalorder %v461, %v509
  %vm562 = vcmp.eq.s32.totalorder %v461, %v512
  %vm563 = vcmp.eq.s32.totalorder %v461, %v515
  %vm564 = vcmp.eq.s32.totalorder %v461, %v518
  %vm565 = vcmp.eq.s32.totalorder %v461, %v521
  %vm566 = vcmp.eq.s32.totalorder %v461, %v524
  %vm567 = vcmp.eq.s32.totalorder %v461, %v527
  %vm568 = vcmp.eq.s32.totalorder %v461, %v530
  %vm569 = vcmp.eq.s32.totalorder %v461, %v533
  %vm570 = vcmp.eq.s32.totalorder %v461, %v536
  %vm571 = vcmp.eq.s32.totalorder %v461, %v539
  %vm572 = vcmp.eq.s32.totalorder %v461, %v542
  %vm573 = vcmp.eq.s32.totalorder %v461, %v545
  %v574 = vsel %vm546, %v124, 0.0
  %v575 = vsel %vm547, %v125, 0.0
  %v576 = vsel %vm548, %v126, 0.0
  %v577 = vsel %vm549, %v127, 0.0
  %v578 = vsel %vm550, %v128, 0.0
  %v579 = vsel %vm551, %v129, 0.0
  %v580 = vsel %vm552, %v130, 0.0
  %v581 = vsel %vm553, %v131, 0.0
  %v582 = vsel %vm554, %v132, 0.0
  %v583 = vsel %vm555, %v133, 0.0
  %v584 = vsel %vm556, %v134, 0.0
  %v585 = vsel %vm557, %v135, 0.0
  %v586 = vsel %vm558, %v136, 0.0
  %v587 = vsel %vm559, %v137, 0.0
  %v588 = vsel %vm560, %v138, 0.0
  %v589 = vsel %vm561, %v139, 0.0
  %v590 = vsel %vm562, %v140, 0.0
  %v591 = vsel %vm563, %v141, 0.0
  %v592 = vsel %vm564, %v142, 0.0
  %v593 = vsel %vm565, %v143, 0.0
  %v594 = vsel %vm566, %v144, 0.0
  %v595 = vsel %vm567, %v145, 0.0
  %v596 = vsel %vm568, %v146, 0.0
  %v597 = vsel %vm569, %v147, 0.0
  %v598 = vsel %vm570, %v148, 0.0
  %v599 = vsel %vm571, %v149, 0.0
  %v600 = vsel %vm572, %v150, 0.0
  %v601 = vsel %vm573, %v151, 0.0
  %v602 = vsel %vm39, %v574, 0.0
  %603 = vadd.xlane.f32.xlu0 %v602
  %v604 = vpop.xlane.xlu0 %603
  %v605 = vsel %vm39, %v575, 0.0
  %606 = vadd.xlane.f32.xlu0 %v605
  %v607 = vpop.xlane.xlu0 %606
  %v608 = vsel %vm39, %v576, 0.0
  %609 = vadd.xlane.f32.xlu0 %v608
  %v610 = vpop.xlane.xlu0 %609
  %v611 = vsel %vm39, %v577, 0.0
  %612 = vadd.xlane.f32.xlu0 %v611
  %v613 = vpop.xlane.xlu0 %612
  %v614 = vsel %vm39, %v578, 0.0
  %615 = vadd.xlane.f32.xlu0 %v614
  %v616 = vpop.xlane.xlu0 %615
  %v617 = vsel %vm39, %v579, 0.0
  %618 = vadd.xlane.f32.xlu0 %v617
  %v619 = vpop.xlane.xlu0 %618
  %v620 = vsel %vm39, %v580, 0.0
  %621 = vadd.xlane.f32.xlu0 %v620
  %v622 = vpop.xlane.xlu0 %621
  %v623 = vsel %vm39, %v581, 0.0
  %624 = vadd.xlane.f32.xlu0 %v623
  %v625 = vpop.xlane.xlu0 %624
  %v626 = vsel %vm39, %v582, 0.0
  %627 = vadd.xlane.f32.xlu0 %v626
  %v628 = vpop.xlane.xlu0 %627
  %v629 = vsel %vm39, %v583, 0.0
  %630 = vadd.xlane.f32.xlu0 %v629
  %v631 = vpop.xlane.xlu0 %630
  %v632 = vsel %vm39, %v584, 0.0
  %633 = vadd.xlane.f32.xlu0 %v632
  %v634 = vpop.xlane.xlu0 %633
  %v635 = vsel %vm39, %v585, 0.0
  %636 = vadd.xlane.f32.xlu0 %v635
  %v637 = vpop.xlane.xlu0 %636
  %v638 = vsel %vm39, %v586, 0.0
  %639 = vadd.xlane.f32.xlu0 %v638
  %v640 = vpop.xlane.xlu0 %639
  %v641 = vsel %vm39, %v587, 0.0
  %642 = vadd.xlane.f32.xlu0 %v641
  %v643 = vpop.xlane.xlu0 %642
  %v644 = vsel %vm39, %v588, 0.0
  %645 = vadd.xlane.f32.xlu0 %v644
  %v646 = vpop.xlane.xlu0 %645
  %v647 = vsel %vm39, %v589, 0.0
  %648 = vadd.xlane.f32.xlu0 %v647
  %v649 = vpop.xlane.xlu0 %648
  %v650 = vsel %vm39, %v590, 0.0
  %651 = vadd.xlane.f32.xlu0 %v650
  %v652 = vpop.xlane.xlu0 %651
  %v653 = vsel %vm39, %v591, 0.0
  %654 = vadd.xlane.f32.xlu0 %v653
  %v655 = vpop.xlane.xlu0 %654
  %v656 = vsel %vm39, %v592, 0.0
  %657 = vadd.xlane.f32.xlu0 %v656
  %v658 = vpop.xlane.xlu0 %657
  %v659 = vsel %vm39, %v593, 0.0
  %660 = vadd.xlane.f32.xlu0 %v659
  %v661 = vpop.xlane.xlu0 %660
  %v662 = vsel %vm39, %v594, 0.0
  %663 = vadd.xlane.f32.xlu0 %v662
  %v664 = vpop.xlane.xlu0 %663
  %v665 = vsel %vm39, %v595, 0.0
  %666 = vadd.xlane.f32.xlu0 %v665
  %v667 = vpop.xlane.xlu0 %666
  %v668 = vsel %vm39, %v596, 0.0
  %669 = vadd.xlane.f32.xlu0 %v668
  %v670 = vpop.xlane.xlu0 %669
  %v671 = vsel %vm39, %v597, 0.0
  %672 = vadd.xlane.f32.xlu0 %v671
  %v673 = vpop.xlane.xlu0 %672
  %v674 = vsel %vm39, %v598, 0.0
  %675 = vadd.xlane.f32.xlu0 %v674
  %v676 = vpop.xlane.xlu0 %675
  %v677 = vsel %vm39, %v599, 0.0
  %678 = vadd.xlane.f32.xlu0 %v677
  %v679 = vpop.xlane.xlu0 %678
  %v680 = vsel %vm39, %v600, 0.0
  %681 = vadd.xlane.f32.xlu0 %v680
  %v682 = vpop.xlane.xlu0 %681
  %v683 = vsel %vm39, %v601, 0.0
  %684 = vadd.xlane.f32.xlu0 %v683
  %v685 = vpop.xlane.xlu0 %684
  %v686 = vmul.f32 %v350, 0.003125
  %v687 = vmul.f32 %v353, 0.003125
  %v688 = vmul.f32 %v356, 0.003125
  %v689 = vmul.f32 %v359, 0.003125
  %v690 = vmul.f32 %v362, 0.003125
  %v691 = vmul.f32 %v365, 0.003125
  %v692 = vmul.f32 %v368, 0.003125
  %v693 = vmul.f32 %v371, 0.003125
  %v694 = vmul.f32 %v374, 0.003125
  %v695 = vmul.f32 %v377, 0.003125
  %v696 = vmul.f32 %v380, 0.003125
  %v697 = vmul.f32 %v383, 0.003125
  %v698 = vmul.f32 %v386, 0.003125
  %v699 = vmul.f32 %v389, 0.003125
  %v700 = vmul.f32 %v392, 0.003125
  %v701 = vmul.f32 %v395, 0.003125
  %v702 = vmul.f32 %v398, 0.003125
  %v703 = vmul.f32 %v401, 0.003125
  %v704 = vmul.f32 %v404, 0.003125
  %v705 = vmul.f32 %v407, 0.003125
  %v706 = vmul.f32 %v410, 0.003125
  %v707 = vmul.f32 %v413, 0.003125
  %v708 = vmul.f32 %v416, 0.003125
  %v709 = vmul.f32 %v419, 0.003125
  %v710 = vmul.f32 %v422, 0.003125
  %v711 = vmul.f32 %v425, 0.003125
  %v712 = vmul.f32 %v428, 0.003125
  %v713 = vmul.f32 %v431, 0.003125
  %v714 = vsub.f32 %v293, %v686
  %v715 = vsub.f32 %v295, %v687
  %v716 = vsub.f32 %v297, %v688
  %v717 = vsub.f32 %v299, %v689
  %v718 = vsub.f32 %v301, %v690
  %v719 = vsub.f32 %v303, %v691
  %v720 = vsub.f32 %v305, %v692
  %v721 = vsub.f32 %v307, %v693
  %v722 = vsub.f32 %v309, %v694
  %v723 = vsub.f32 %v311, %v695
  %v724 = vsub.f32 %v313, %v696
  %v725 = vsub.f32 %v315, %v697
  %v726 = vsub.f32 %v317, %v698
  %v727 = vsub.f32 %v319, %v699
  %v728 = vsub.f32 %v321, %v700
  %v729 = vsub.f32 %v323, %v701
  %v730 = vsub.f32 %v325, %v702
  %v731 = vsub.f32 %v327, %v703
  %v732 = vsub.f32 %v329, %v704
  %v733 = vsub.f32 %v331, %v705
  %v734 = vsub.f32 %v333, %v706
  %v735 = vsub.f32 %v335, %v707
  %v736 = vsub.f32 %v337, %v708
  %v737 = vsub.f32 %v339, %v709
  %v738 = vsub.f32 %v341, %v710
  %v739 = vsub.f32 %v343, %v711
  %v740 = vsub.f32 %v345, %v712
  %v741 = vsub.f32 %v347, %v713
  %v742 = vmul.f32 %v604, 0.9
  %v743 = vmul.f32 %v607, 0.9
  %v744 = vmul.f32 %v610, 0.9
  %v745 = vmul.f32 %v613, 0.9
  %v746 = vmul.f32 %v616, 0.9
  %v747 = vmul.f32 %v619, 0.9
  %v748 = vmul.f32 %v622, 0.9
  %v749 = vmul.f32 %v625, 0.9
  %v750 = vmul.f32 %v628, 0.9
  %v751 = vmul.f32 %v631, 0.9
  %v752 = vmul.f32 %v634, 0.9
  %v753 = vmul.f32 %v637, 0.9
  %v754 = vmul.f32 %v640, 0.9
  %v755 = vmul.f32 %v643, 0.9
  %v756 = vmul.f32 %v646, 0.9
  %v757 = vmul.f32 %v649, 0.9
  %v758 = vmul.f32 %v652, 0.9
  %v759 = vmul.f32 %v655, 0.9
  %v760 = vmul.f32 %v658, 0.9
  %v761 = vmul.f32 %v661, 0.9
  %v762 = vmul.f32 %v664, 0.9
  %v763 = vmul.f32 %v667, 0.9
  %v764 = vmul.f32 %v670, 0.9
  %v765 = vmul.f32 %v673, 0.9
  %v766 = vmul.f32 %v676, 0.9
  %v767 = vmul.f32 %v679, 0.9
  %v768 = vmul.f32 %v682, 0.9
  %v769 = vmul.f32 %v685, 0.9
  %v770 = vsub.f32 %v714, %v742
  %v771 = vsub.f32 %v715, %v743
  %v772 = vsub.f32 %v716, %v744
  %v773 = vsub.f32 %v717, %v745
  %v774 = vsub.f32 %v718, %v746
  %v775 = vsub.f32 %v719, %v747
  %v776 = vsub.f32 %v720, %v748
  %v777 = vsub.f32 %v721, %v749
  %v778 = vsub.f32 %v722, %v750
  %v779 = vsub.f32 %v723, %v751
  %v780 = vsub.f32 %v724, %v752
  %v781 = vsub.f32 %v725, %v753
  %v782 = vsub.f32 %v726, %v754
  %v783 = vsub.f32 %v727, %v755
  %v784 = vsub.f32 %v728, %v756
  %v785 = vsub.f32 %v729, %v757
  %v786 = vsub.f32 %v730, %v758
  %v787 = vsub.f32 %v731, %v759
  %v788 = vsub.f32 %v732, %v760
  %v789 = vsub.f32 %v733, %v761
  %v790 = vsub.f32 %v734, %v762
  %v791 = vsub.f32 %v735, %v763
  %v792 = vsub.f32 %v736, %v764
  %v793 = vsub.f32 %v737, %v765
  %v794 = vsub.f32 %v738, %v766
  %v795 = vsub.f32 %v739, %v767
  %v796 = vsub.f32 %v740, %v768
  %v797 = vsub.f32 %v741, %v769
  %vm798 = vcmask 7168
  %799 = vst.msk [vmem:[%s2] sm:$0xff] %vm798, %v770
  %800 = vst.msk [vmem:[%s2 + $0x8] sm:$0xff] %vm798, %v771
  %801 = vst.msk [vmem:[%s2 + $0x10] sm:$0xff] %vm798, %v772
  %802 = vst.msk [vmem:[%s2 + $0x18] sm:$0xff] %vm798, %v773
  %803 = vst.msk [vmem:[%s2 + $0x20] sm:$0xff] %vm798, %v774
  %804 = vst.msk [vmem:[%s2 + $0x28] sm:$0xff] %vm798, %v775
  %805 = vst.msk [vmem:[%s2 + $0x30] sm:$0xff] %vm798, %v776
  %806 = vst.msk [vmem:[%s2 + $0x38] sm:$0xff] %vm798, %v777
  %807 = vst.msk [vmem:[%s2 + $0x40] sm:$0xff] %vm798, %v778
  %808 = vst.msk [vmem:[%s2 + $0x48] sm:$0xff] %vm798, %v779
  %809 = vst.msk [vmem:[%s2 + $0x50] sm:$0xff] %vm798, %v780
  %810 = vst.msk [vmem:[%s2 + $0x58] sm:$0xff] %vm798, %v781
  %811 = vst.msk [vmem:[%s2 + $0x60] sm:$0xff] %vm798, %v782
  %812 = vst.msk [vmem:[%s2 + $0x68] sm:$0xff] %vm798, %v783
  %813 = vst.msk [vmem:[%s2 + $0x70] sm:$0xff] %vm798, %v784
  %814 = vst.msk [vmem:[%s2 + $0x78] sm:$0xff] %vm798, %v785
  %815 = vst.msk [vmem:[%s2 + $0x80] sm:$0xff] %vm798, %v786
  %816 = vst.msk [vmem:[%s2 + $0x88] sm:$0xff] %vm798, %v787
  %817 = vst.msk [vmem:[%s2 + $0x90] sm:$0xff] %vm798, %v788
  %818 = vst.msk [vmem:[%s2 + $0x98] sm:$0xff] %vm798, %v789
  %819 = vst.msk [vmem:[%s2 + $0xa0] sm:$0xff] %vm798, %v790
  %820 = vst.msk [vmem:[%s2 + $0xa8] sm:$0xff] %vm798, %v791
  %821 = vst.msk [vmem:[%s2 + $0xb0] sm:$0xff] %vm798, %v792
  %822 = vst.msk [vmem:[%s2 + $0xb8] sm:$0xff] %vm798, %v793
  %823 = vst.msk [vmem:[%s2 + $0xc0] sm:$0xff] %vm798, %v794
  %824 = vst.msk [vmem:[%s2 + $0xc8] sm:$0xff] %vm798, %v795
  %825 = vst.msk [vmem:[%s2 + $0xd0] sm:$0xff] %vm798, %v796
  %826 = vst.msk [vmem:[%s2 + $0xd8] sm:$0xff] %vm798, %v797
  // Predicated region
  $region10: #{tpu_custom_call.1} parent=0 // pred_check
    _
  $region11: #{tpu_custom_call.1} parent=0 // pred_check_branch
    %828 = sbr.rel (0) target = $region13
  $region12: #{tpu_custom_call.1} parent=0 // pred_region
    _
  $region13: #{tpu_custom_call.1} parent=0 // pred_fallthru
    _
  // Predicated region
  $region14: #{tpu_custom_call.1} parent=0 // pred_check
    _
  $region15: #{tpu_custom_call.1} parent=0 // pred_check_branch
    %830 = sbr.rel (0) target = $region17
  $region16: #{tpu_custom_call.1} parent=0 // pred_region
    _
  $region17: #{tpu_custom_call.1} parent=0 // pred_fallthru
    _

</llo_original>
